<compile_context>
chip_gen: v7x
topology: tpu7x:2x2x1
jax: 0.10.0
libtpu: 0.0.40
codegen_flags: <defaults>
</compile_context>

<pallas_src>
import math

import jax
import jax.numpy as jnp
from jax.experimental import pallas as pl
from jax.experimental.pallas import tpu as pltpu


def _add_pe_kernel(x_ref, pe_ref, o_ref):
    # x_ref : (TS, TB, D) tile of the input  (seq, batch, d_model)
    # pe_ref: (TS, D)     matching tile of the positional-encoding table
    # One explicit broadcast per tile, then a pure elementwise (VPU) add.
    pe = jnp.broadcast_to(pe_ref[...][:, None, :], x_ref.shape)
    o_ref[...] = x_ref[...] + pe


def make_positional_encoding(d_model: int, max_len: int = 5000,
                             dtype=jnp.float32) -> jnp.ndarray:
    """Builds the (max_len, d_model) sin/cos table exactly like the module's __init__."""
    pos = jnp.arange(max_len, dtype=jnp.float32)[:, None]                 # (max_len, 1)
    div = jnp.exp(jnp.arange(0, d_model, 2, dtype=jnp.float32)
                  * (-(math.log(10000.0) / d_model)))                     # (ceil(D/2),)
    pe = jnp.zeros((max_len, d_model), dtype=jnp.float32)
    pe = pe.at[:, 0::2].set(jnp.sin(pos * div))
    # Guard odd d_model: the 1::2 slice has floor(D/2) columns.
    pe = pe.at[:, 1::2].set(jnp.cos(pos * div)[:, : d_model // 2])
    return pe.astype(dtype)


def _pick_batch_tile(B: int) -> int:
    """Sublane-dense batch tile: multiple-of-8 divisor of B (capped at 64), else full B."""
    if B % 8 != 0:
        return B  # block dim == full array dim satisfies the sublane rule
    for t in range(min(B, 64), 0, -8):
        if B % t == 0:
            return t
    return B


def _pick_seq_tile(S: int, row_bytes: int, budget_bytes: int) -> int:
    """Largest seq tile (divisor of S; multiple of 8 unless == S) whose
    double-buffered in+out footprint stays under budget_bytes."""
    max_rows = max(1, budget_bytes // (4 * row_bytes))  # x in + out, each 2x buffered
    if S <= max_rows:
        return S
    divisors = [d for d in range(1, S + 1) if S % d == 0]
    fitting = [d for d in divisors if d % 8 == 0 and d <= max_rows]
    if fitting:
        return max(fitting)
    aligned = [d for d in divisors if d % 8 == 0]
    if aligned:
        return min(aligned)  # layout-legal but over budget; vmem_limit covers it
    return S                 # S has no multiple-of-8 divisor: single seq block


def positional_encoding_forward(x: jnp.ndarray, pe: jnp.ndarray, *,
                                vmem_budget_bytes: int = 8 << 20,
                                donate_x: bool = False) -> jnp.ndarray:
    """x: (S, B, D); pe: (max_len, D).  Returns x + pe[:S, None, :]."""
    S, B, D = x.shape
    itemsize = jnp.dtype(x.dtype).itemsize

    # Match dtypes at the boundary: avoids implicit f32 promotion in-kernel and
    # halves HBM traffic for bf16 inputs.  (S, D) slice is tiny glue work.
    pe_slice = pe[:S, :].astype(x.dtype)

    batch_tile = _pick_batch_tile(B)
    seq_tile = _pick_seq_tile(S, batch_tile * D * itemsize, vmem_budget_bytes)
    assert S % seq_tile == 0 and B % batch_tile == 0

    grid = (S // seq_tile, B // batch_tile)

    tile_bytes = seq_tile * batch_tile * D * itemsize
    pe_tile_bytes = seq_tile * D * itemsize
    est_vmem = 4 * tile_bytes + 2 * pe_tile_bytes      # in+out double-buffered + pe
    vmem_limit = int(min(64 << 20, max(32 << 20, 2 * est_vmem)))

    cost = pl.CostEstimate(
        flops=S * B * D,
        transcendentals=0,
        bytes_accessed=(2 * S * B * D + S * D) * itemsize)

    return pl.pallas_call(
        _add_pe_kernel,
        out_shape=jax.ShapeDtypeStruct((S, B, D), x.dtype),
        grid_spec=pltpu.PrefetchScalarGridSpec(
            num_scalar_prefetch=0,
            grid=grid,
            in_specs=[
                pl.BlockSpec((seq_tile, batch_tile, D), lambda i, b: (i, b, 0)),
                # pe block index is constant across the (inner) batch axis, so the
                # pe tile stays resident in VMEM and is not re-DMA'd per batch step.
                pl.BlockSpec((seq_tile, D), lambda i, b: (i, 0)),
            ],
            out_specs=pl.BlockSpec((seq_tile, batch_tile, D),
                                   lambda i, b: (i, b, 0)),
        ),
        compiler_params=pltpu.CompilerParams(
            dimension_semantics=("parallel", "parallel"),
            vmem_limit_bytes=vmem_limit),
        cost_estimate=cost,
        input_output_aliases=({0: 0} if donate_x else {}),
    )(x, pe_slice)


if __name__ == "__main__":
    key = jax.random.PRNGKey(0)

    # Small shapes consistent with the module: seq=8, batch=2, d_model=32.
    S, B, D = 8, 2, 32
    MAX_LEN = 64
    x = jax.random.normal(key, (S, B, D), dtype=jnp.float32)
    pe = make_positional_encoding(D, max_len=MAX_LEN)

    out = jax.block_until_ready(positional_encoding_forward(x, pe))
    ref = x + pe[:S, :].astype(x.dtype)[:, None, :]
    assert out.shape == (S, B, D)
    assert out.dtype == x.dtype
    assert jnp.allclose(out, ref, atol=1e-6), "mismatch vs reference (small case)"

    # Second check: larger bf16 input with a tight VMEM budget to exercise the
    # multi-step, software-pipelined grid path (seq_tile < S).
    S2, B2, D2 = 256, 16, 128
    x2 = jax.random.normal(jax.random.PRNGKey(1), (S2, B2, D2), dtype=jnp.bfloat16)
    pe2 = make_positional_encoding(D2, max_len=512)
    out2 = jax.block_until_ready(
        positional_encoding_forward(x2, pe2, vmem_budget_bytes=1 << 20))
    ref2 = x2 + pe2[:S2, :].astype(x2.dtype)[:, None, :]
    assert out2.shape == (S2, B2, D2)
    assert out2.dtype == x2.dtype
    assert jnp.allclose(out2.astype(jnp.float32), ref2.astype(jnp.float32),
                        atol=1e-2), "mismatch vs reference (tiled bf16 case)"

    print("KERNEL_OK")
</pallas_src>

<mosaic_0001>
module attributes {stable_mosaic.version = 11 : i64} {
  func.func @_add_pe_kernel(%arg0: i32, %arg1: i32, %arg2: memref<8x2x32xf32, #tpu.memory_space<vmem>>, %arg3: memref<8x32xf32, #tpu.memory_space<vmem>>, %arg4: memref<8x2x32xf32, #tpu.memory_space<vmem>>) attributes {dimension_semantics = [#tpu.dimension_semantics<parallel>, #tpu.dimension_semantics<parallel>], iteration_bounds = array<i64: 1, 1>, scalar_prefetch = 0 : i64, scratch_operands = 0 : i64, tpu.core_type = #tpu.core_type<tc>, window_params = [{transform_indices = @transform_0, window_bounds = array<i64: 8, 2, 32>}, {transform_indices = @transform_1, window_bounds = array<i64: 8, 32>}, {transform_indices = @transform_2, window_bounds = array<i64: 8, 2, 32>}]} {
    %c0 = arith.constant 0 : index
    %c0_0 = arith.constant 0 : index
    %0 = vector.load %arg3[%c0, %c0_0] : memref<8x32xf32, #tpu.memory_space<vmem>>, vector<8x32xf32>
    %1 = vector.shape_cast %0 : vector<8x32xf32> to vector<8x1x32xf32>
    %2 = vector.shape_cast %1 : vector<8x1x32xf32> to vector<8x1x32xf32>
    %3 = vector.broadcast %2 : vector<8x1x32xf32> to vector<8x2x32xf32>
    %c0_1 = arith.constant 0 : index
    %c0_2 = arith.constant 0 : index
    %c0_3 = arith.constant 0 : index
    %4 = vector.load %arg2[%c0_1, %c0_2, %c0_3] : memref<8x2x32xf32, #tpu.memory_space<vmem>>, vector<8x2x32xf32>
    %5 = arith.addf %4, %3 : vector<8x2x32xf32>
    %c0_4 = arith.constant 0 : index
    %c0_5 = arith.constant 0 : index
    %c0_6 = arith.constant 0 : index
    %6 = vector.load %arg4[%c0_4, %c0_5, %c0_6] : memref<8x2x32xf32, #tpu.memory_space<vmem>>, vector<8x2x32xf32>
    tpu.vector_store %arg4[%c0_4, %c0_5, %c0_6], %5 {strides = array<i32>} : memref<8x2x32xf32, #tpu.memory_space<vmem>>, vector<8x2x32xf32>,
    return
  }
  func.func @transform_0(%arg0: i32, %arg1: i32) -> (i32, i32, i32) {
    %c0_i32 = arith.constant 0 : i32
    %c0_i32_0 = arith.constant 0 : i32
    return %arg0, %arg1, %c0_i32 : i32, i32, i32
  }
  func.func @transform_1(%arg0: i32, %arg1: i32) -> (i32, i32) {
    %c0_i32 = arith.constant 0 : i32
    %c0_i32_0 = arith.constant 0 : i32
    return %arg0, %c0_i32 : i32, i32
  }
  func.func @transform_2(%arg0: i32, %arg1: i32) -> (i32, i32, i32) {
    %c0_i32 = arith.constant 0 : i32
    %c0_i32_0 = arith.constant 0 : i32
    return %arg0, %arg1, %c0_i32 : i32, i32, i32
  }
}

</mosaic_0001>

<llo_original>
// kernel: tpu_custom_call.1
$region0: #{tpu_custom_call.1}
  #allocation0 [shape = 'u32[]', space=smem, size = 0x4, offset = 0x4, fixed_abs, tag = 'smem constant byte address 0x4 - core index']
  #allocation1 [shape = 'u32[144,128]{1,0:T(1,128)}', space=vmem, size = 0x12000, scoped, tag = 'internal scratch']
  %s0 = inlined_call_operand.hbm [shape: f32[8,2,32], index: 0, kind: input, shape index: {}]
  %s1 = inlined_call_operand.hbm [shape: f32[8,32], index: 1, kind: input, shape index: {}]
  %s2 = inlined_call_operand.hbm [shape: f32[8,2,32], index: 2, kind: output, shape index: {}]
  %s3 = sld [smem:[#allocation0]]
  $region26: #{tpu_custom_call.1} parent=0
    _
  %s5 = ssub.s32 1, %s3
  %s6 = scalar_select 0, %s5, %s3
  $region1: #{tpu_custom_call.1} parent=0
    #allocation2 [shape = 'u8[8192]{0}', space=vmem, size = 0x2000, scoped, tag = 'input window, operand 0, single buffered']
    #allocation3 [shape = 's32[1]{0}', space=sflag, size = 0x4, scoped, tag = 'scoped memory for tpu_custom_call.1']
    #allocation4 [shape = 's32[1]{0}', space=sflag, size = 0x4, scoped, tag = 'scoped memory for tpu_custom_call.1']
    #allocation5 [shape = 'u8[4096]{0}', space=vmem, size = 0x1000, scoped, tag = 'input window, operand 1, single buffered']
    #allocation6 [shape = 's32[1]{0}', space=sflag, size = 0x4, scoped, tag = 'scoped memory for tpu_custom_call.1']
    #allocation7 [shape = 'u8[8192]{0}', space=vmem, size = 0x2000, scoped, tag = 'output window, operand 0, single buffered']
    %7 = vsyncpa [#allocation3], 0
    %8 = vsyncpa [#allocation6], 0
    %9 = vsyncpa [#allocation4], 0
    // Predicated region
    $region2: #{tpu_custom_call.1} parent=1 // pred_check
      _
    $region3: #{tpu_custom_call.1} parent=1 // pred_check_branch
      %11 = sbr.rel (0) target = $region5
    $region4: #{tpu_custom_call.1} parent=1 // pred_region
      %s13 = ssub.s32 256, 256
      %14 = vsyncadd [#allocation3], %s13
      %s15 = sshll.u32 [#allocation2], 4
      %s16 = int_to_ptr.vmem [resolvable:$true] %s15
      %21 = dma.hbm_to_vmem [thread:$0]  %s0, 256, %s16, [#allocation3], 32, 32, 2
    $region5: #{tpu_custom_call.1} parent=1 // pred_fallthru
      _
    // Predicated region
    $region6: #{tpu_custom_call.1} parent=1 // pred_check
      _
    $region7: #{tpu_custom_call.1} parent=1 // pred_check_branch
      %23 = sbr.rel (0) target = $region9
    $region8: #{tpu_custom_call.1} parent=1 // pred_region
      %s25 = ssub.s32 128, 128
      %26 = vsyncadd [#allocation6], %s25
      %s28 = sshll.u32 [#allocation5], 4
      %s29 = int_to_ptr.vmem [resolvable:$true] %s28
      %31 = dma.hbm_to_vmem [thread:$0]  %s1, 128, %s29, [#allocation6]
    $region9: #{tpu_custom_call.1} parent=1 // pred_fallthru
      _
    // Predicated region
    $region10: #{tpu_custom_call.1} parent=1 // pred_check
      _
    $region11: #{tpu_custom_call.1} parent=1 // pred_check_branch
      %33 = sbr.rel (0) target = $region13
    $region12: #{tpu_custom_call.1} parent=1 // pred_region
      %34 = dma.done [#allocation3], 256
    $region13: #{tpu_custom_call.1} parent=1 // pred_fallthru
      _
    // Predicated region
    $region14: #{tpu_custom_call.1} parent=1 // pred_check
      _
    $region15: #{tpu_custom_call.1} parent=1 // pred_check_branch
      %36 = sbr.rel (0) target = $region17
    $region16: #{tpu_custom_call.1} parent=1 // pred_region
      %37 = dma.done [#allocation6], 128
    $region17: #{tpu_custom_call.1} parent=1 // pred_fallthru
      _
    %v38 = vld [vmem:[#allocation5] sm:$0xff]
    %v40 = vcombine.high %v38, %v38
    %v42 = vunpack.c.l.s4 1966171168
    %v43 = vunpack.c.0.s8 %v42
    %v44 = vlaneseq
    %v45 = vshrl.u32 %v44, 7
    %v46 = vsub.s32 %v43, %v45
    %v47 = vrot.slane %v38, %v46
    %v49 = vunpack.c.l.s4 1966171168
    %v50 = vunpack.c.0.s8 %v49
    %v51 = vlaneseq
    %v52 = vshrl.u32 %v51, 7
    %v53 = vsub.s32 %v50, %v52
    %v54 = vrot.slane %v40, %v53
    %v55 = vcombine.high %v47, %v47
    %v56 = vcombine.high %v54, %v54
    %v58 = vunpack.c.l.s4 1966171168
    %v59 = vunpack.c.0.s8 %v58
    %v60 = vlaneseq
    %v61 = vshrl.u32 %v60, 7
    %v62 = vsub.s32 %v59, %v61
    %v63 = vrot.slane %v47, %v62
    %v65 = vunpack.c.l.s4 1966171168
    %v66 = vunpack.c.0.s8 %v65
    %v67 = vlaneseq
    %v68 = vshrl.u32 %v67, 7
    %v69 = vsub.s32 %v66, %v68
    %v70 = vrot.slane %v54, %v69
    %v72 = vunpack.c.l.s4 1966171168
    %v73 = vunpack.c.0.s8 %v72
    %v74 = vlaneseq
    %v75 = vshrl.u32 %v74, 7
    %v76 = vsub.s32 %v73, %v75
    %v77 = vrot.slane %v55, %v76
    %v79 = vunpack.c.l.s4 1966171168
    %v80 = vunpack.c.0.s8 %v79
    %v81 = vlaneseq
    %v82 = vshrl.u32 %v81, 7
    %v83 = vsub.s32 %v80, %v82
    %v84 = vrot.slane %v56, %v83
    %v85 = vcombine.high %v63, %v63
    %v86 = vcombine.high %v70, %v70
    %v87 = vcombine.high %v77, %v77
    %v88 = vcombine.high %v84, %v84
    %v89 = vlaneseq
    %v90 = vshrl.u32 %v89, 7
    %v91 = vsub.s32 0, %v90
    %v92 = vrot.slane %v63, %v91
    %v93 = vlaneseq
    %v94 = vshrl.u32 %v93, 7
    %v95 = vsub.s32 0, %v94
    %v96 = vrot.slane %v77, %v95
    %v97 = vlaneseq
    %v98 = vshrl.u32 %v97, 7
    %v99 = vsub.s32 0, %v98
    %v100 = vrot.slane %v85, %v99
    %v101 = vlaneseq
    %v102 = vshrl.u32 %v101, 7
    %v103 = vsub.s32 0, %v102
    %v104 = vrot.slane %v87, %v103
    %v105 = vlaneseq
    %v106 = vshrl.u32 %v105, 7
    %v107 = vsub.s32 0, %v106
    %v108 = vrot.slane %v70, %v107
    %v109 = vlaneseq
    %v110 = vshrl.u32 %v109, 7
    %v111 = vsub.s32 0, %v110
    %v112 = vrot.slane %v84, %v111
    %v113 = vlaneseq
    %v114 = vshrl.u32 %v113, 7
    %v115 = vsub.s32 0, %v114
    %v116 = vrot.slane %v86, %v115
    %v117 = vlaneseq
    %v118 = vshrl.u32 %v117, 7
    %v119 = vsub.s32 0, %v118
    %v120 = vrot.slane %v88, %v119
    %v129 = vld [vmem:[#allocation2] sm:$0x3]
    %v130 = vld [vmem:[#allocation2 + $0x2] sm:$0x3]
    %v131 = vld [vmem:[#allocation2 + $0x4] sm:$0x3]
    %v132 = vld [vmem:[#allocation2 + $0x6] sm:$0x3]
    %v133 = vld [vmem:[#allocation2 + $0x8] sm:$0x3]
    %v134 = vld [vmem:[#allocation2 + $0xa] sm:$0x3]
    %v135 = vld [vmem:[#allocation2 + $0xc] sm:$0x3]
    %v136 = vld [vmem:[#allocation2 + $0xe] sm:$0x3]
    %v137 = vadd.f32 %v129, %v92
    %v138 = vadd.f32 %v130, %v96
    %v139 = vadd.f32 %v131, %v100
    %v140 = vadd.f32 %v132, %v104
    %v141 = vadd.f32 %v133, %v108
    %v142 = vadd.f32 %v134, %v112
    %v143 = vadd.f32 %v135, %v116
    %v144 = vadd.f32 %v136, %v120
    %vm145 = vcmask 254976
    %146 = vst.msk [vmem:[#allocation7] sm:$0x3] %vm145, %v137
    %147 = vst.msk [vmem:[#allocation7 + $0x2] sm:$0x3] %vm145, %v138
    %148 = vst.msk [vmem:[#allocation7 + $0x4] sm:$0x3] %vm145, %v139
    %149 = vst.msk [vmem:[#allocation7 + $0x6] sm:$0x3] %vm145, %v140
    %150 = vst.msk [vmem:[#allocation7 + $0x8] sm:$0x3] %vm145, %v141
    %151 = vst.msk [vmem:[#allocation7 + $0xa] sm:$0x3] %vm145, %v142
    %152 = vst.msk [vmem:[#allocation7 + $0xc] sm:$0x3] %vm145, %v143
    %153 = vst.msk [vmem:[#allocation7 + $0xe] sm:$0x3] %vm145, %v144
    // Predicated region
    $region18: #{tpu_custom_call.1} parent=1 // pred_check
      _
    $region19: #{tpu_custom_call.1} parent=1 // pred_check_branch
      %155 = sbr.rel (0) target = $region21
    $region20: #{tpu_custom_call.1} parent=1 // pred_region
      %s157 = ssub.s32 256, 256
      %158 = vsyncadd [#allocation4], %s157
      %s159 = sshll.u32 [#allocation7], 4
      %s160 = int_to_ptr.vmem [resolvable:$true] %s159
      %165 = dma.vmem_to_hbm [thread:$0]  %s160, 256, %s2, [#allocation4], 32, 32, 2
    $region21: #{tpu_custom_call.1} parent=1 // pred_fallthru
      _
    // Predicated region
    $region22: #{tpu_custom_call.1} parent=1 // pred_check
      _
    $region23: #{tpu_custom_call.1} parent=1 // pred_check_branch
      %167 = sbr.rel (0) target = $region25
    $region24: #{tpu_custom_call.1} parent=1 // pred_region
      %168 = dma.done [#allocation4], 256
    $region25: #{tpu_custom_call.1} parent=1 // pred_fallthru
      _
    %169 = vsyncpa [#allocation3], 1
    %170 = vsyncpa [#allocation6], 1
    %171 = vsyncpa [#allocation4], 1

</llo_original>
